<compile_context>
chip_gen: v7x
topology: tpu7x:2x2x1
jax: 0.10.0
libtpu: 0.0.40
codegen_flags: <defaults>
</compile_context>

<pallas_src>
import jax
import jax.numpy as jnp
from jax.experimental import pallas as pl
from jax.experimental.pallas import tpu as pltpu


def context_model_kernel(x_ref,
                         w1_ref, b1_ref,
                         w2_ref, b2_ref,
                         w3_ref, b3_ref,
                         w4_ref, b4_ref,
                         out_ref):
    # layer 0: Linear(ctx_dim, 256) + ReLU   (normalization pre-folded into w1/b1)
    h = jnp.dot(x_ref[...], w1_ref[...], preferred_element_type=jnp.float32)
    h = jnp.maximum(h + b1_ref[...], 0.0)

    # layer 1: Linear(256, 128) + ReLU
    h = jnp.dot(h, w2_ref[...], preferred_element_type=jnp.float32)
    h = jnp.maximum(h + b2_ref[...], 0.0)

    # layer 2: Linear(128, 64) + ReLU
    h = jnp.dot(h, w3_ref[...], preferred_element_type=jnp.float32)
    h = jnp.maximum(h + b3_ref[...], 0.0)

    # output layer: Linear(64, 128-padded)  (no activation)
    out = jnp.dot(h, w4_ref[...], preferred_element_type=jnp.float32) + b4_ref[...]
    out_ref[...] = out.astype(out_ref.dtype)


def context_model_forward(cp_obs, cp_act,
                          obs_mean, obs_std, act_mean, act_std,
                          params, *, batch_tile=1024):
    """params = dict with w1..w4, b1..b4 (weights stored as [in, out])."""
    eps = jnp.float32(1e-10)
    obs_dim = cp_obs.shape[-1]
    act_dim = cp_act.shape[-1]
    ctx_dim = obs_dim + act_dim
    B = cp_obs.shape[0]
    out_dim = params["w4"].shape[1]

    # --- fold normalization affine into layer 0 (one-time O(ctx_dim*256)) ---
    inv = jnp.concatenate([1.0 / (obs_std.astype(jnp.float32) + eps),
                           1.0 / (act_std.astype(jnp.float32) + eps)])
    mean = jnp.concatenate([obs_mean, act_mean]).astype(jnp.float32)
    w1 = params["w1"].astype(jnp.float32) * inv[:, None]
    b1 = params["b1"].astype(jnp.float32) - (mean * inv) @ params["w1"].astype(jnp.float32)

    # --- lane-dense output: pad last layer N 10 -> 128, slice after the call ---
    n_pad = 128
    w4 = jnp.pad(params["w4"].astype(jnp.float32), ((0, 0), (0, n_pad - out_dim)))
    b4 = jnp.pad(params["b4"].astype(jnp.float32), (0, n_pad - out_dim))

    # --- pack obs/act once so the kernel does a single K=ctx_dim matmul ---
    x = jnp.concatenate([cp_obs, cp_act], axis=-1).astype(jnp.float32)

    # --- batch tiling (pad B to a multiple of the tile, slice back at the end) ---
    if B <= batch_tile:
        tb = max(8, ((B + 7) // 8) * 8)
    else:
        tb = batch_tile
    b_pad = pl.cdiv(B, tb) * tb
    if b_pad != B:
        x = jnp.pad(x, ((0, b_pad - B), (0, 0)))
    grid = (b_pad // tb,)

    h1 = params["w2"].shape[0]   # 256
    h2 = params["w3"].shape[0]   # 128
    h3 = params["w4"].shape[0]   # 64

    tile_map = lambda i: (i, 0)
    const_map = lambda i: (0, 0)   # weights/biases: DMA once, VMEM-resident

    in_specs = [
        pl.BlockSpec((tb, ctx_dim), tile_map),
        pl.BlockSpec((ctx_dim, h1), const_map),
        pl.BlockSpec((1, h1), const_map),
        pl.BlockSpec((h1, h2), const_map),
        pl.BlockSpec((1, h2), const_map),
        pl.BlockSpec((h2, h3), const_map),
        pl.BlockSpec((1, h3), const_map),
        pl.BlockSpec((h3, n_pad), const_map),
        pl.BlockSpec((1, n_pad), const_map),
    ]
    out_specs = pl.BlockSpec((tb, n_pad), tile_map)

    flops = 2 * b_pad * (ctx_dim * h1 + h1 * h2 + h2 * h3 + h3 * n_pad)
    bytes_accessed = 4 * (b_pad * (ctx_dim + n_pad)
                          + ctx_dim * h1 + h1 * h2 + h2 * h3 + h3 * n_pad
                          + h1 + h2 + h3 + n_pad)

    out = pl.pallas_call(
        context_model_kernel,
        out_shape=jax.ShapeDtypeStruct((b_pad, n_pad), jnp.float32),
        grid_spec=pltpu.PrefetchScalarGridSpec(
            num_scalar_prefetch=0,
            grid=grid,
            in_specs=in_specs,
            out_specs=out_specs,
        ),
        compiler_params=pltpu.CompilerParams(
            dimension_semantics=("parallel",),
            vmem_limit_bytes=32 * 1024 * 1024,
        ),
        cost_estimate=pl.CostEstimate(flops=flops, transcendentals=0,
                                      bytes_accessed=bytes_accessed),
    )(x,
      w1, b1.reshape(1, -1),
      params["w2"].astype(jnp.float32), params["b2"].astype(jnp.float32).reshape(1, -1),
      params["w3"].astype(jnp.float32), params["b3"].astype(jnp.float32).reshape(1, -1),
      w4, b4.reshape(1, -1))

    return out[:B, :out_dim]


def init_params(key, context_dim, hidden_sizes=(256, 128, 64), out_dim=10):
    """Deterministic init matching the nn.Linear shapes (stored as [in, out])."""
    sizes = [context_dim] + list(hidden_sizes) + [out_dim]
    params = {}
    keys = jax.random.split(key, 2 * (len(sizes) - 1))
    for i in range(len(sizes) - 1):
        fan_in, fan_out = sizes[i], sizes[i + 1]
        bound = 1.0 / jnp.sqrt(jnp.float32(fan_in))
        w = jax.random.uniform(keys[2 * i], (fan_in, fan_out),
                               minval=-bound, maxval=bound, dtype=jnp.float32)
        b = jax.random.uniform(keys[2 * i + 1], (fan_out,),
                               minval=-bound, maxval=bound, dtype=jnp.float32)
        params[f"w{i + 1}"] = w
        params[f"b{i + 1}"] = b
    return params


def reference_forward(cp_obs, cp_act, obs_mean, obs_std, act_mean, act_std, params):
    eps = 1e-10
    o = (cp_obs - obs_mean) / (obs_std + eps)
    a = (cp_act - act_mean) / (act_std + eps)
    x = jnp.concatenate([o, a], axis=-1)
    h = jnp.maximum(x @ params["w1"] + params["b1"], 0.0)
    h = jnp.maximum(h @ params["w2"] + params["b2"], 0.0)
    h = jnp.maximum(h @ params["w3"] + params["b3"], 0.0)
    return h @ params["w4"] + params["b4"]


if __name__ == "__main__":
    key = jax.random.PRNGKey(0)
    k_obs, k_act, k_om, k_os, k_am, k_as, k_p = jax.random.split(key, 7)

    batch = 8
    obs_dim = 16
    act_dim = 16
    context_dim = obs_dim + act_dim  # 32

    cp_obs = jax.random.normal(k_obs, (batch, obs_dim), dtype=jnp.float32)
    cp_act = jax.random.normal(k_act, (batch, act_dim), dtype=jnp.float32)
    obs_mean = jax.random.normal(k_om, (obs_dim,), dtype=jnp.float32)
    obs_std = jax.random.uniform(k_os, (obs_dim,), minval=0.5, maxval=1.5,
                                 dtype=jnp.float32)
    act_mean = jax.random.normal(k_am, (act_dim,), dtype=jnp.float32)
    act_std = jax.random.uniform(k_as, (act_dim,), minval=0.5, maxval=1.5,
                                 dtype=jnp.float32)

    params = init_params(k_p, context_dim)

    out = context_model_forward(cp_obs, cp_act, obs_mean, obs_std,
                                act_mean, act_std, params)
    out = jax.block_until_ready(out)

    ref = reference_forward(cp_obs, cp_act, obs_mean, obs_std,
                            act_mean, act_std, params)
    assert out.shape == (batch, 10)
    assert jnp.allclose(out, ref, atol=1e-4, rtol=1e-4)

    print("KERNEL_OK")
</pallas_src>

<mosaic_0001>
module attributes {stable_mosaic.version = 11 : i64} {
  func.func @context_model_kernel(%arg0: i32, %arg1: memref<8x32xf32, #tpu.memory_space<vmem>>, %arg2: memref<32x256xf32, #tpu.memory_space<vmem>>, %arg3: memref<1x256xf32, #tpu.memory_space<vmem>>, %arg4: memref<256x128xf32, #tpu.memory_space<vmem>>, %arg5: memref<1x128xf32, #tpu.memory_space<vmem>>, %arg6: memref<128x64xf32, #tpu.memory_space<vmem>>, %arg7: memref<1x64xf32, #tpu.memory_space<vmem>>, %arg8: memref<64x128xf32, #tpu.memory_space<vmem>>, %arg9: memref<1x128xf32, #tpu.memory_space<vmem>>, %arg10: memref<8x128xf32, #tpu.memory_space<vmem>>) attributes {dimension_semantics = [#tpu.dimension_semantics<parallel>], iteration_bounds = array<i64: 1>, scalar_prefetch = 0 : i64, scratch_operands = 0 : i64, tpu.core_type = #tpu.core_type<tc>, window_params = [{transform_indices = @transform_0, window_bounds = array<i64: 8, 32>}, {pipeline_mode = #tpu.pipeline_mode<synchronous>, transform_indices = @transform_1, window_bounds = array<i64: 32, 256>}, {pipeline_mode = #tpu.pipeline_mode<synchronous>, transform_indices = @transform_2, window_bounds = array<i64: 1, 256>}, {pipeline_mode = #tpu.pipeline_mode<synchronous>, transform_indices = @transform_3, window_bounds = array<i64: 256, 128>}, {pipeline_mode = #tpu.pipeline_mode<synchronous>, transform_indices = @transform_4, window_bounds = array<i64: 1, 128>}, {pipeline_mode = #tpu.pipeline_mode<synchronous>, transform_indices = @transform_5, window_bounds = array<i64: 128, 64>}, {pipeline_mode = #tpu.pipeline_mode<synchronous>, transform_indices = @transform_6, window_bounds = array<i64: 1, 64>}, {pipeline_mode = #tpu.pipeline_mode<synchronous>, transform_indices = @transform_7, window_bounds = array<i64: 64, 128>}, {pipeline_mode = #tpu.pipeline_mode<synchronous>, transform_indices = @transform_8, window_bounds = array<i64: 1, 128>}, {transform_indices = @transform_9, window_bounds = array<i64: 8, 128>}]} {
    %c0 = arith.constant 0 : index
    %c0_0 = arith.constant 0 : index
    %0 = vector.load %arg1[%c0, %c0_0] : memref<8x32xf32, #tpu.memory_space<vmem>>, vector<8x32xf32>
    %c0_1 = arith.constant 0 : index
    %c0_2 = arith.constant 0 : index
    %1 = vector.load %arg2[%c0_1, %c0_2] : memref<32x256xf32, #tpu.memory_space<vmem>>, vector<32x256xf32>
    %cst = arith.constant dense<0.000000e+00> : vector<8x256xf32>
    %2 = tpu.matmul %0, %1, %cst {dimension_numbers = #tpu.dot_dimension_numbers<[1], [0], [0], [1], [0, 0, 1, 1], [], []>} : vector<8x32xf32>, vector<32x256xf32>, vector<8x256xf32> -> vector<8x256xf32>
    %c0_3 = arith.constant 0 : index
    %c0_4 = arith.constant 0 : index
    %3 = vector.load %arg3[%c0_3, %c0_4] : memref<1x256xf32, #tpu.memory_space<vmem>>, vector<1x256xf32>
    %4 = vector.broadcast %3 : vector<1x256xf32> to vector<8x256xf32>
    %5 = arith.addf %2, %4 : vector<8x256xf32>
    %cst_5 = arith.constant 0.000000e+00 : f32
    %6 = vector.broadcast %cst_5 : f32 to vector<8x256xf32>
    %7 = arith.maximumf %5, %6 : vector<8x256xf32>
    %c0_6 = arith.constant 0 : index
    %c0_7 = arith.constant 0 : index
    %8 = vector.load %arg4[%c0_6, %c0_7] : memref<256x128xf32, #tpu.memory_space<vmem>>, vector<256x128xf32>
    %cst_8 = arith.constant dense<0.000000e+00> : vector<8x128xf32>
    %9 = tpu.matmul %7, %8, %cst_8 {dimension_numbers = #tpu.dot_dimension_numbers<[1], [0], [0], [1], [0, 0, 1, 1], [], []>} : vector<8x256xf32>, vector<256x128xf32>, vector<8x128xf32> -> vector<8x128xf32>
    %c0_9 = arith.constant 0 : index
    %c0_10 = arith.constant 0 : index
    %10 = vector.load %arg5[%c0_9, %c0_10] : memref<1x128xf32, #tpu.memory_space<vmem>>, vector<1x128xf32>
    %11 = vector.broadcast %10 : vector<1x128xf32> to vector<8x128xf32>
    %12 = arith.addf %9, %11 : vector<8x128xf32>
    %cst_11 = arith.constant 0.000000e+00 : f32
    %13 = vector.broadcast %cst_11 : f32 to vector<8x128xf32>
    %14 = arith.maximumf %12, %13 : vector<8x128xf32>
    %c0_12 = arith.constant 0 : index
    %c0_13 = arith.constant 0 : index
    %15 = vector.load %arg6[%c0_12, %c0_13] : memref<128x64xf32, #tpu.memory_space<vmem>>, vector<128x64xf32>
    %cst_14 = arith.constant dense<0.000000e+00> : vector<8x64xf32>
    %16 = tpu.matmul %14, %15, %cst_14 {dimension_numbers = #tpu.dot_dimension_numbers<[1], [0], [0], [1], [0, 0, 1, 1], [], []>} : vector<8x128xf32>, vector<128x64xf32>, vector<8x64xf32> -> vector<8x64xf32>
    %c0_15 = arith.constant 0 : index
    %c0_16 = arith.constant 0 : index
    %17 = vector.load %arg7[%c0_15, %c0_16] : memref<1x64xf32, #tpu.memory_space<vmem>>, vector<1x64xf32>
    %18 = vector.broadcast %17 : vector<1x64xf32> to vector<8x64xf32>
    %19 = arith.addf %16, %18 : vector<8x64xf32>
    %cst_17 = arith.constant 0.000000e+00 : f32
    %20 = vector.broadcast %cst_17 : f32 to vector<8x64xf32>
    %21 = arith.maximumf %19, %20 : vector<8x64xf32>
    %c0_18 = arith.constant 0 : index
    %c0_19 = arith.constant 0 : index
    %22 = vector.load %arg8[%c0_18, %c0_19] : memref<64x128xf32, #tpu.memory_space<vmem>>, vector<64x128xf32>
    %cst_20 = arith.constant dense<0.000000e+00> : vector<8x128xf32>
    %23 = tpu.matmul %21, %22, %cst_20 {dimension_numbers = #tpu.dot_dimension_numbers<[1], [0], [0], [1], [0, 0, 1, 1], [], []>} : vector<8x64xf32>, vector<64x128xf32>, vector<8x128xf32> -> vector<8x128xf32>
    %c0_21 = arith.constant 0 : index
    %c0_22 = arith.constant 0 : index
    %24 = vector.load %arg9[%c0_21, %c0_22] : memref<1x128xf32, #tpu.memory_space<vmem>>, vector<1x128xf32>
    %25 = vector.broadcast %24 : vector<1x128xf32> to vector<8x128xf32>
    %26 = arith.addf %23, %25 : vector<8x128xf32>
    %c0_23 = arith.constant 0 : index
    %c0_24 = arith.constant 0 : index
    %27 = vector.load %arg10[%c0_23, %c0_24] : memref<8x128xf32, #tpu.memory_space<vmem>>, vector<8x128xf32>
    tpu.vector_store %arg10[%c0_23, %c0_24], %26 {strides = array<i32>} : memref<8x128xf32, #tpu.memory_space<vmem>>, vector<8x128xf32>,
    return
  }
  func.func @transform_0(%arg0: i32) -> (i32, i32) {
    %c0_i32 = arith.constant 0 : i32
    %c0_i32_0 = arith.constant 0 : i32
    return %arg0, %c0_i32 : i32, i32
  }
  func.func @transform_1(%arg0: i32) -> (i32, i32) {
    %c0_i32 = arith.constant 0 : i32
    %c0_i32_0 = arith.constant 0 : i32
    %c0_i32_1 = arith.constant 0 : i32
    return %c0_i32, %c0_i32_0 : i32, i32
  }
  func.func @transform_2(%arg0: i32) -> (i32, i32) {
    %c0_i32 = arith.constant 0 : i32
    %c0_i32_0 = arith.constant 0 : i32
    %c0_i32_1 = arith.constant 0 : i32
    return %c0_i32, %c0_i32_0 : i32, i32
  }
  func.func @transform_3(%arg0: i32) -> (i32, i32) {
    %c0_i32 = arith.constant 0 : i32
    %c0_i32_0 = arith.constant 0 : i32
    %c0_i32_1 = arith.constant 0 : i32
    return %c0_i32, %c0_i32_0 : i32, i32
  }
  func.func @transform_4(%arg0: i32) -> (i32, i32) {
    %c0_i32 = arith.constant 0 : i32
    %c0_i32_0 = arith.constant 0 : i32
    %c0_i32_1 = arith.constant 0 : i32
    return %c0_i32, %c0_i32_0 : i32, i32
  }
  func.func @transform_5(%arg0: i32) -> (i32, i32) {
    %c0_i32 = arith.constant 0 : i32
    %c0_i32_0 = arith.constant 0 : i32
    %c0_i32_1 = arith.constant 0 : i32
    return %c0_i32, %c0_i32_0 : i32, i32
  }
  func.func @transform_6(%arg0: i32) -> (i32, i32) {
    %c0_i32 = arith.constant 0 : i32
    %c0_i32_0 = arith.constant 0 : i32
    %c0_i32_1 = arith.constant 0 : i32
    return %c0_i32, %c0_i32_0 : i32, i32
  }
  func.func @transform_7(%arg0: i32) -> (i32, i32) {
    %c0_i32 = arith.constant 0 : i32
    %c0_i32_0 = arith.constant 0 : i32
    %c0_i32_1 = arith.constant 0 : i32
    return %c0_i32, %c0_i32_0 : i32, i32
  }
  func.func @transform_8(%arg0: i32) -> (i32, i32) {
    %c0_i32 = arith.constant 0 : i32
    %c0_i32_0 = arith.constant 0 : i32
    %c0_i32_1 = arith.constant 0 : i32
    return %c0_i32, %c0_i32_0 : i32, i32
  }
  func.func @transform_9(%arg0: i32) -> (i32, i32) {
    %c0_i32 = arith.constant 0 : i32
    %c0_i32_0 = arith.constant 0 : i32
    return %arg0, %c0_i32 : i32, i32
  }
}

</mosaic_0001>

<llo_original>
// kernel: tpu_custom_call.1
$region0: #{tpu_custom_call.1}
  #allocation0 [shape = 'u32[]', space=smem, size = 0x4, offset = 0x4, fixed_abs, tag = 'smem constant byte address 0x4 - core index']
  #allocation1 [shape = 'u32[144,128]{1,0:T(1,128)}', space=vmem, size = 0x12000, scoped, tag = 'internal scratch']
  %s0 = inlined_call_operand.vmem [shape: f32[8,32], index: 0, kind: input, shape index: {}]
  %s1 = inlined_call_operand.vmem [shape: f32[32,256], index: 1, kind: input, shape index: {}]
  %s2 = inlined_call_operand.vmem [shape: f32[1,256], index: 2, kind: input, shape index: {}]
  %s3 = inlined_call_operand.hbm [shape: f32[256,128], index: 3, kind: input, shape index: {}]
  %s4 = inlined_call_operand.vmem [shape: f32[1,128], index: 4, kind: input, shape index: {}]
  %s5 = inlined_call_operand.vmem [shape: f32[128,64], index: 5, kind: input, shape index: {}]
  %s6 = inlined_call_operand.vmem [shape: f32[1,64], index: 6, kind: input, shape index: {}]
  %s7 = inlined_call_operand.vmem [shape: f32[64,128], index: 7, kind: input, shape index: {}]
  %s8 = inlined_call_operand.vmem [shape: f32[1,128], index: 8, kind: input, shape index: {}]
  %s9 = inlined_call_operand.hbm [shape: f32[8,128], index: 9, kind: output, shape index: {}]
  %s10 = sld [smem:[#allocation0]]
  $region50: #{tpu_custom_call.1} parent=0
    _
  %s12 = ssub.s32 1, %s10
  %s13 = scalar_select 0, %s12, %s10
  $region1: #{tpu_custom_call.1} parent=0
    #allocation2 [shape = 'u8[131072]{0}', space=vmem, size = 0x20000, scoped, tag = 'input window, operand 3, single buffered']
    #allocation3 [shape = 's32[1]{0}', space=sflag, size = 0x4, scoped, tag = 'scoped memory for tpu_custom_call.1']
    #allocation4 [shape = 's32[1]{0}', space=sflag, size = 0x4, scoped, tag = 'scoped memory for tpu_custom_call.1']
    #allocation5 [shape = 'u8[4096]{0}', space=vmem, size = 0x1000, scoped, tag = 'output window, operand 0, single buffered']
    %14 = vsyncpa [#allocation3], 0
    %15 = vsyncpa [#allocation4], 0
    // Predicated region
    $region2: #{tpu_custom_call.1} parent=1 // pred_check
      _
    $region3: #{tpu_custom_call.1} parent=1 // pred_check_branch
      %17 = sbr.rel (0) target = $region5
    $region4: #{tpu_custom_call.1} parent=1 // pred_region
      _
    $region5: #{tpu_custom_call.1} parent=1 // pred_fallthru
      _
    // Predicated region
    $region6: #{tpu_custom_call.1} parent=1 // pred_check
      _
    $region7: #{tpu_custom_call.1} parent=1 // pred_check_branch
      %19 = sbr.rel (0) target = $region9
    $region8: #{tpu_custom_call.1} parent=1 // pred_region
      _
    $region9: #{tpu_custom_call.1} parent=1 // pred_fallthru
      _
    // Predicated region
    $region10: #{tpu_custom_call.1} parent=1 // pred_check
      _
    $region11: #{tpu_custom_call.1} parent=1 // pred_check_branch
      %21 = sbr.rel (0) target = $region13
    $region12: #{tpu_custom_call.1} parent=1 // pred_region
      _
    $region13: #{tpu_custom_call.1} parent=1 // pred_fallthru
      _
    // Predicated region
    $region14: #{tpu_custom_call.1} parent=1 // pred_check
      _
    $region15: #{tpu_custom_call.1} parent=1 // pred_check_branch
      %23 = sbr.rel (0) target = $region17
    $region16: #{tpu_custom_call.1} parent=1 // pred_region
      %s25 = ssub.s32 4096, 4096
      %26 = vsyncadd [#allocation3], %s25
      %s27 = sshll.u32 [#allocation2], 4
      %s28 = int_to_ptr.vmem [resolvable:$true] %s27
      %33 = dma.hbm_to_vmem [thread:$0]  %s3, 4096, %s28, [#allocation3], 128, 128, 8
    $region17: #{tpu_custom_call.1} parent=1 // pred_fallthru
      _
    // Predicated region
    $region18: #{tpu_custom_call.1} parent=1 // pred_check
      _
    $region19: #{tpu_custom_call.1} parent=1 // pred_check_branch
      %35 = sbr.rel (0) target = $region21
    $region20: #{tpu_custom_call.1} parent=1 // pred_region
      _
    $region21: #{tpu_custom_call.1} parent=1 // pred_fallthru
      _
    // Predicated region
    $region22: #{tpu_custom_call.1} parent=1 // pred_check
      _
    $region23: #{tpu_custom_call.1} parent=1 // pred_check_branch
      %37 = sbr.rel (0) target = $region25
    $region24: #{tpu_custom_call.1} parent=1 // pred_region
      _
    $region25: #{tpu_custom_call.1} parent=1 // pred_fallthru
      _
    // Predicated region
    $region26: #{tpu_custom_call.1} parent=1 // pred_check
      _
    $region27: #{tpu_custom_call.1} parent=1 // pred_check_branch
      %39 = sbr.rel (0) target = $region29
    $region28: #{tpu_custom_call.1} parent=1 // pred_region
      _
    $region29: #{tpu_custom_call.1} parent=1 // pred_fallthru
      _
    // Predicated region
    $region30: #{tpu_custom_call.1} parent=1 // pred_check
      _
    $region31: #{tpu_custom_call.1} parent=1 // pred_check_branch
      %41 = sbr.rel (0) target = $region33
    $region32: #{tpu_custom_call.1} parent=1 // pred_region
      _
    $region33: #{tpu_custom_call.1} parent=1 // pred_fallthru
      _
    // Predicated region
    $region34: #{tpu_custom_call.1} parent=1 // pred_check
      _
    $region35: #{tpu_custom_call.1} parent=1 // pred_check_branch
      %43 = sbr.rel (0) target = $region37
    $region36: #{tpu_custom_call.1} parent=1 // pred_region
      _
    $region37: #{tpu_custom_call.1} parent=1 // pred_fallthru
      _
    // Predicated region
    $region38: #{tpu_custom_call.1} parent=1 // pred_check
      _
    $region39: #{tpu_custom_call.1} parent=1 // pred_check_branch
      %45 = sbr.rel (0) target = $region41
    $region40: #{tpu_custom_call.1} parent=1 // pred_region
      %46 = dma.done [#allocation3], 4096
    $region41: #{tpu_custom_call.1} parent=1 // pred_fallthru
      _
    %v47 = vld [vmem:[%s0] sm:$0xff]
    %v48 = vld [vmem:[%s1] sm:$0xff]
    %v49 = vld [vmem:[%s1 + $0x8] sm:$0xff]
    %v50 = vld [vmem:[%s1 + $0x10] sm:$0xff]
    %v51 = vld [vmem:[%s1 + $0x18] sm:$0xff]
    %v52 = vld [vmem:[%s1 + $0x20] sm:$0xff]
    %v53 = vld [vmem:[%s1 + $0x28] sm:$0xff]
    %v54 = vld [vmem:[%s1 + $0x30] sm:$0xff]
    %v55 = vld [vmem:[%s1 + $0x38] sm:$0xff]
    %v56 = vld [vmem:[%s2] sm:$0x3]
    %v58 = vlaneseq
    %v59 = vshrl.u32 %v58, 7
    %v60 = vsub.s32 0, %v59
    %v61 = vrot.slane %v56, %v60
    %v62 = vlaneseq
    %v63 = vshrl.u32 %v62, 7
    %v64 = vsub.s32 1, %v63
    %v65 = vrot.slane %v56, %v64
    %vm68 = vcmask 261120
    %v70 = vsel %vm68, %v47, 0
    %72 = vmatprep.subr.mxu0 %v49
    %73 = vmatpush1.msra.mxu0 %v48
    %74 = vmatprep.subr.mxu0 %v51
    %75 = vmatpush1.msra.mxu0 %v50
    %76 = vmatprep.subr.mxu0 %v53
    %77 = vmatpush1.msra.mxu0 %v52
    %78 = vmatprep.subr.mxu0 %v55
    %79 = vmatpush1.msra.mxu0 %v54
    %80 = vmatprep.subr.mxu0 0.0
    %81 = vmatpush1.msra.mxu0 0.0
    %82 = vmatprep.subr.mxu0 0.0
    %83 = vmatpush1.msra.mxu0 0.0
    %84 = vmatprep.subr.mxu0 0.0
    %85 = vmatpush1.msra.mxu0 0.0
    %86 = vmatprep.subr.mxu0 0.0
    %87 = vmatpush1.msra.mxu0 0.0
    %88 = vmatprep.subr.mxu0 0.0
    %89 = vmatpush1.msra.mxu0 0.0
    %90 = vmatprep.subr.mxu0 0.0
    %91 = vmatpush1.msra.mxu0 0.0
    %92 = vmatprep.subr.mxu0 0.0
    %93 = vmatpush1.msra.mxu0 0.0
    %94 = vmatprep.subr.mxu0 0.0
    %95 = vmatpush1.msra.mxu0 0.0
    %96 = vmatprep.subr.mxu0 0.0
    %97 = vmatpush1.msra.mxu0 0.0
    %98 = vmatprep.subr.mxu0 0.0
    %99 = vmatpush1.msra.mxu0 0.0
    %100 = vmatprep.subr.mxu0 0.0
    %101 = vmatpush1.msra.mxu0 0.0
    %102 = vmatprep.subr.mxu0 0.0
    %103 = vmatpush1.msra.mxu0 0.0
    %104 = vmatprep.subr.mxu0 0.0
    %105 = vmatpush1.msra.mxu0 0.0
    %106 = vmatprep.subr.mxu0 0.0
    %107 = vmatpush1.msra.mxu0 0.0
    %108 = vmatprep.subr.mxu0 0.0
    %109 = vmatpush1.msra.mxu0 0.0
    %110 = vmatprep.subr.mxu0 0.0
    %111 = vmatpush1.msra.mxu0 0.0
    %112 = vmatprep.subr.mxu0 0.0
    %113 = vmatpush1.msra.mxu0 0.0
    %114 = vmatprep.subr.mxu0 0.0
    %115 = vmatpush1.msra.mxu0 0.0
    %116 = vmatprep.subr.mxu0 0.0
    %117 = vmatpush1.msra.mxu0 0.0
    %118 = vmatprep.subr.mxu0 0.0
    %119 = vmatpush1.msra.mxu0 0.0
    %120 = vmatprep.subr.mxu0 0.0
    %121 = vmatpush1.msra.mxu0 0.0
    %122 = vmatprep.subr.mxu0 0.0
    %123 = vmatpush1.msra.mxu0 0.0
    %124 = vmatprep.subr.mxu0 0.0
    %125 = vmatpush1.msra.mxu0 0.0
    %126 = vmatprep.subr.mxu0 0.0
    %127 = vmatpush1.msra.mxu0 0.0
    %128 = vmatprep.subr.mxu0 0.0
    %129 = vmatpush1.msra.mxu0 0.0
    %130 = vmatprep.subr.mxu0 0.0
    %131 = vmatpush1.msra.mxu0 0.0
    %132 = vmatprep.subr.mxu0 0.0
    %133 = vmatpush1.msra.mxu0 0.0
    %134 = vmatprep.subr.mxu0 0.0
    %135 = vmatpush1.msra.mxu0 0.0
    %136 = vmatprep.mubr.f32.mxu0 0.0
    %137 = vmatmul.mubr.f32.gmra.mrb[0].mxu0 %v70
    %v138 = vpop.f32.mrb[0].mxu0
    %v139 = vadd.f32 %v61, %v138
    %v140 = vpop.f32.mrb[0].mxu0
    %v141 = vadd.f32 %v65, %v140
    %142 = vdwg.mxu0
    %v143 = vmax.f32 %v139, 0.0
    %v144 = vmax.f32 %v141, 0.0
    %v145 = vld [vmem:[#allocation2] sm:$0xff]
    %v146 = vld [vmem:[#allocation2 + $0x8] sm:$0xff]
    %v147 = vld [vmem:[#allocation2 + $0x10] sm:$0xff]
    %v148 = vld [vmem:[#allocation2 + $0x18] sm:$0xff]
    %v149 = vld [vmem:[#allocation2 + $0x20] sm:$0xff]
    %v150 = vld [vmem:[#allocation2 + $0x28] sm:$0xff]
    %v151 = vld [vmem:[#allocation2 + $0x30] sm:$0xff]
    %v152 = vld [vmem:[#allocation2 + $0x38] sm:$0xff]
    %v153 = vld [vmem:[#allocation2 + $0x40] sm:$0xff]
    %v154 = vld [vmem:[#allocation2 + $0x48] sm:$0xff]
    %v155 = vld [vmem:[#allocation2 + $0x50] sm:$0xff]
    %v156 = vld [vmem:[#allocation2 + $0x58] sm:$0xff]
    %v157 = vld [vmem:[#allocation2 + $0x60] sm:$0xff]
    %v158 = vld [vmem:[#allocation2 + $0x68] sm:$0xff]
    %v159 = vld [vmem:[#allocation2 + $0x70] sm:$0xff]
    %v160 = vld [vmem:[#allocation2 + $0x78] sm:$0xff]
    %v161 = vld [vmem:[#allocation2 + $0x80] sm:$0xff]
    %v162 = vld [vmem:[#allocation2 + $0x88] sm:$0xff]
    %v163 = vld [vmem:[#allocation2 + $0x90] sm:$0xff]
    %v164 = vld [vmem:[#allocation2 + $0x98] sm:$0xff]
    %v165 = vld [vmem:[#allocation2 + $0xa0] sm:$0xff]
    %v166 = vld [vmem:[#allocation2 + $0xa8] sm:$0xff]
    %v167 = vld [vmem:[#allocation2 + $0xb0] sm:$0xff]
    %v168 = vld [vmem:[#allocation2 + $0xb8] sm:$0xff]
    %v169 = vld [vmem:[#allocation2 + $0xc0] sm:$0xff]
    %v170 = vld [vmem:[#allocation2 + $0xc8] sm:$0xff]
    %v171 = vld [vmem:[#allocation2 + $0xd0] sm:$0xff]
    %v172 = vld [vmem:[#allocation2 + $0xd8] sm:$0xff]
    %v173 = vld [vmem:[#allocation2 + $0xe0] sm:$0xff]
    %v174 = vld [vmem:[#allocation2 + $0xe8] sm:$0xff]
    %v175 = vld [vmem:[#allocation2 + $0xf0] sm:$0xff]
    %v176 = vld [vmem:[#allocation2 + $0xf8] sm:$0xff]
    %v177 = vld [vmem:[%s4] sm:$0x1]
    %v179 = vlaneseq
    %v180 = vshrl.u32 %v179, 7
    %v181 = vsub.s32 0, %v180
    %v182 = vrot.slane %v177, %v181
    %184 = vmatprep.subr.mxu0 0.0
    %185 = vmatpush1.msra.mxu0 %v145
    %186 = vmatprep.subr.mxu0 0.0
    %187 = vmatpush1.msra.mxu0 %v146
    %188 = vmatprep.subr.mxu0 0.0
    %189 = vmatpush1.msra.mxu0 %v147
    %190 = vmatprep.subr.mxu0 0.0
    %191 = vmatpush1.msra.mxu0 %v148
    %192 = vmatprep.subr.mxu0 0.0
    %193 = vmatpush1.msra.mxu0 %v149
    %194 = vmatprep.subr.mxu0 0.0
    %195 = vmatpush1.msra.mxu0 %v150
    %196 = vmatprep.subr.mxu0 0.0
    %197 = vmatpush1.msra.mxu0 %v151
    %198 = vmatprep.subr.mxu0 0.0
    %199 = vmatpush1.msra.mxu0 %v152
    %200 = vmatprep.subr.mxu0 0.0
    %201 = vmatpush1.msra.mxu0 %v153
    %202 = vmatprep.subr.mxu0 0.0
    %203 = vmatpush1.msra.mxu0 %v154
    %204 = vmatprep.subr.mxu0 0.0
    %205 = vmatpush1.msra.mxu0 %v155
    %206 = vmatprep.subr.mxu0 0.0
    %207 = vmatpush1.msra.mxu0 %v156
    %208 = vmatprep.subr.mxu0 0.0
    %209 = vmatpush1.msra.mxu0 %v157
    %210 = vmatprep.subr.mxu0 0.0
    %211 = vmatpush1.msra.mxu0 %v158
    %212 = vmatprep.subr.mxu0 0.0
    %213 = vmatpush1.msra.mxu0 %v159
    %214 = vmatprep.subr.mxu0 0.0
    %215 = vmatpush1.msra.mxu0 %v160
    %216 = vmatprep.subr.mxu0 0.0
    %217 = vmatpush1.msra.mxu0 %v161
    %218 = vmatprep.subr.mxu0 0.0
    %219 = vmatpush1.msra.mxu0 %v162
    %220 = vmatprep.subr.mxu0 0.0
    %221 = vmatpush1.msra.mxu0 %v163
    %222 = vmatprep.subr.mxu0 0.0
    %223 = vmatpush1.msra.mxu0 %v164
    %224 = vmatprep.subr.mxu0 0.0
    %225 = vmatpush1.msra.mxu0 %v165
    %226 = vmatprep.subr.mxu0 0.0
    %227 = vmatpush1.msra.mxu0 %v166
    %228 = vmatprep.subr.mxu0 0.0
    %229 = vmatpush1.msra.mxu0 %v167
    %230 = vmatprep.subr.mxu0 0.0
    %231 = vmatpush1.msra.mxu0 %v168
    %232 = vmatprep.subr.mxu0 0.0
    %233 = vmatpush1.msra.mxu0 %v169
    %234 = vmatprep.subr.mxu0 0.0
    %235 = vmatpush1.msra.mxu0 %v170
    %236 = vmatprep.subr.mxu0 0.0
    %237 = vmatpush1.msra.mxu0 %v171
    %238 = vmatprep.subr.mxu0 0.0
    %239 = vmatpush1.msra.mxu0 %v172
    %240 = vmatprep.subr.mxu0 0.0
    %241 = vmatpush1.msra.mxu0 %v173
    %242 = vmatprep.subr.mxu0 0.0
    %243 = vmatpush1.msra.mxu0 %v174
    %244 = vmatprep.subr.mxu0 0.0
    %245 = vmatpush1.msra.mxu0 %v175
    %246 = vmatprep.subr.mxu0 0.0
    %247 = vmatpush1.msra.mxu0 %v176
    %248 = vmatprep.mubr.f32.mxu0 %v144
    %249 = vmatmul.mubr.f32.gmra.mrb[0].mxu0 %v143
    %v250 = vpop.f32.mrb[0].mxu0
    %v251 = vadd.f32 %v182, %v250
    %v252 = vpop.f32.mrb[0].mxu0
    %253 = vdwg.mxu0
    %v254 = vmax.f32 %v251, 0.0
    %v255 = vld [vmem:[%s5] sm:$0xff]
    %v256 = vld [vmem:[%s5 + $0x8] sm:$0xff]
    %v257 = vld [vmem:[%s5 + $0x10] sm:$0xff]
    %v258 = vld [vmem:[%s5 + $0x18] sm:$0xff]
    %v259 = vld [vmem:[%s5 + $0x20] sm:$0xff]
    %v260 = vld [vmem:[%s5 + $0x28] sm:$0xff]
    %v261 = vld [vmem:[%s5 + $0x30] sm:$0xff]
    %v262 = vld [vmem:[%s5 + $0x38] sm:$0xff]
    %v263 = vld [vmem:[%s5 + $0x40] sm:$0xff]
    %v264 = vld [vmem:[%s5 + $0x48] sm:$0xff]
    %v265 = vld [vmem:[%s5 + $0x50] sm:$0xff]
    %v266 = vld [vmem:[%s5 + $0x58] sm:$0xff]
    %v267 = vld [vmem:[%s5 + $0x60] sm:$0xff]
    %v268 = vld [vmem:[%s5 + $0x68] sm:$0xff]
    %v269 = vld [vmem:[%s5 + $0x70] sm:$0xff]
    %v270 = vld [vmem:[%s5 + $0x78] sm:$0xff]
    %v271 = vld [vmem:[%s6] sm:$0x1]
    %v273 = vlaneseq
    %v274 = vshrl.u32 %v273, 7
    %v275 = vsub.s32 0, %v274
    %v276 = vrot.slane %v271, %v275
    %278 = vmatprep.subr.mxu0 0.0
    %279 = vmatpush1.msra.mxu0 %v255
    %280 = vmatprep.subr.mxu0 0.0
    %281 = vmatpush1.msra.mxu0 %v256
    %282 = vmatprep.subr.mxu0 0.0
    %283 = vmatpush1.msra.mxu0 %v257
    %284 = vmatprep.subr.mxu0 0.0
    %285 = vmatpush1.msra.mxu0 %v258
    %286 = vmatprep.subr.mxu0 0.0
    %287 = vmatpush1.msra.mxu0 %v259
    %288 = vmatprep.subr.mxu0 0.0
    %289 = vmatpush1.msra.mxu0 %v260
    %290 = vmatprep.subr.mxu0 0.0
    %291 = vmatpush1.msra.mxu0 %v261
    %292 = vmatprep.subr.mxu0 0.0
    %293 = vmatpush1.msra.mxu0 %v262
    %294 = vmatprep.subr.mxu0 0.0
    %295 = vmatpush1.msra.mxu0 %v263
    %296 = vmatprep.subr.mxu0 0.0
    %297 = vmatpush1.msra.mxu0 %v264
    %298 = vmatprep.subr.mxu0 0.0
    %299 = vmatpush1.msra.mxu0 %v265
    %300 = vmatprep.subr.mxu0 0.0
    %301 = vmatpush1.msra.mxu0 %v266
    %302 = vmatprep.subr.mxu0 0.0
    %303 = vmatpush1.msra.mxu0 %v267
    %304 = vmatprep.subr.mxu0 0.0
    %305 = vmatpush1.msra.mxu0 %v268
    %306 = vmatprep.subr.mxu0 0.0
    %307 = vmatpush1.msra.mxu0 %v269
    %308 = vmatprep.subr.mxu0 0.0
    %309 = vmatpush1.msra.mxu0 %v270
    %310 = vmatprep.subr.mxu0 0.0
    %311 = vmatpush1.msra.mxu0 0.0
    %312 = vmatprep.subr.mxu0 0.0
    %313 = vmatpush1.msra.mxu0 0.0
    %314 = vmatprep.subr.mxu0 0.0
    %315 = vmatpush1.msra.mxu0 0.0
    %316 = vmatprep.subr.mxu0 0.0
    %317 = vmatpush1.msra.mxu0 0.0
    %318 = vmatprep.subr.mxu0 0.0
    %319 = vmatpush1.msra.mxu0 0.0
    %320 = vmatprep.subr.mxu0 0.0
    %321 = vmatpush1.msra.mxu0 0.0
    %322 = vmatprep.subr.mxu0 0.0
    %323 = vmatpush1.msra.mxu0 0.0
    %324 = vmatprep.subr.mxu0 0.0
    %325 = vmatpush1.msra.mxu0 0.0
    %326 = vmatprep.subr.mxu0 0.0
    %327 = vmatpush1.msra.mxu0 0.0
    %328 = vmatprep.subr.mxu0 0.0
    %329 = vmatpush1.msra.mxu0 0.0
    %330 = vmatprep.subr.mxu0 0.0
    %331 = vmatpush1.msra.mxu0 0.0
    %332 = vmatprep.subr.mxu0 0.0
    %333 = vmatpush1.msra.mxu0 0.0
    %334 = vmatprep.subr.mxu0 0.0
    %335 = vmatpush1.msra.mxu0 0.0
    %336 = vmatprep.subr.mxu0 0.0
    %337 = vmatpush1.msra.mxu0 0.0
    %338 = vmatprep.subr.mxu0 0.0
    %339 = vmatpush1.msra.mxu0 0.0
    %340 = vmatprep.subr.mxu0 0.0
    %341 = vmatpush1.msra.mxu0 0.0
    %342 = vmatprep.mubr.f32.mxu0 0.0
    %343 = vmatmul.mubr.f32.gmra.mrb[0].mxu0 %v254
    %v344 = vpop.f32.mrb[0].mxu0
    %v345 = vadd.f32 %v276, %v344
    %v346 = vpop.f32.mrb[0].mxu0
    %347 = vdwg.mxu0
    %v348 = vmax.f32 %v345, 0.0
    %v349 = vld [vmem:[%s7] sm:$0xff]
    %v350 = vld [vmem:[%s7 + $0x8] sm:$0xff]
    %v351 = vld [vmem:[%s7 + $0x10] sm:$0xff]
    %v352 = vld [vmem:[%s7 + $0x18] sm:$0xff]
    %v353 = vld [vmem:[%s7 + $0x20] sm:$0xff]
    %v354 = vld [vmem:[%s7 + $0x28] sm:$0xff]
    %v355 = vld [vmem:[%s7 + $0x30] sm:$0xff]
    %v356 = vld [vmem:[%s7 + $0x38] sm:$0xff]
    %v357 = vld [vmem:[%s8] sm:$0x1]
    %v359 = vlaneseq
    %v360 = vshrl.u32 %v359, 7
    %v361 = vsub.s32 0, %v360
    %v362 = vrot.slane %v357, %v361
    %vm364 = vcmask 523264
    %v366 = vsel %vm364, %v348, 0
    %368 = vmatprep.subr.mxu0 0.0
    %369 = vmatpush1.msra.mxu0 %v349
    %370 = vmatprep.subr.mxu0 0.0
    %371 = vmatpush1.msra.mxu0 %v350
    %372 = vmatprep.subr.mxu0 0.0
    %373 = vmatpush1.msra.mxu0 %v351
    %374 = vmatprep.subr.mxu0 0.0
    %375 = vmatpush1.msra.mxu0 %v352
    %376 = vmatprep.subr.mxu0 0.0
    %377 = vmatpush1.msra.mxu0 %v353
    %378 = vmatprep.subr.mxu0 0.0
    %379 = vmatpush1.msra.mxu0 %v354
    %380 = vmatprep.subr.mxu0 0.0
    %381 = vmatpush1.msra.mxu0 %v355
    %382 = vmatprep.subr.mxu0 0.0
    %383 = vmatpush1.msra.mxu0 %v356
    %384 = vmatprep.subr.mxu0 0.0
    %385 = vmatpush1.msra.mxu0 0.0
    %386 = vmatprep.subr.mxu0 0.0
    %387 = vmatpush1.msra.mxu0 0.0
    %388 = vmatprep.subr.mxu0 0.0
    %389 = vmatpush1.msra.mxu0 0.0
    %390 = vmatprep.subr.mxu0 0.0
    %391 = vmatpush1.msra.mxu0 0.0
    %392 = vmatprep.subr.mxu0 0.0
    %393 = vmatpush1.msra.mxu0 0.0
    %394 = vmatprep.subr.mxu0 0.0
    %395 = vmatpush1.msra.mxu0 0.0
    %396 = vmatprep.subr.mxu0 0.0
    %397 = vmatpush1.msra.mxu0 0.0
    %398 = vmatprep.subr.mxu0 0.0
    %399 = vmatpush1.msra.mxu0 0.0
    %400 = vmatprep.subr.mxu0 0.0
    %401 = vmatpush1.msra.mxu0 0.0
    %402 = vmatprep.subr.mxu0 0.0
    %403 = vmatpush1.msra.mxu0 0.0
    %404 = vmatprep.subr.mxu0 0.0
    %405 = vmatpush1.msra.mxu0 0.0
    %406 = vmatprep.subr.mxu0 0.0
    %407 = vmatpush1.msra.mxu0 0.0
    %408 = vmatprep.subr.mxu0 0.0
    %409 = vmatpush1.msra.mxu0 0.0
    %410 = vmatprep.subr.mxu0 0.0
    %411 = vmatpush1.msra.mxu0 0.0
    %412 = vmatprep.subr.mxu0 0.0
    %413 = vmatpush1.msra.mxu0 0.0
    %414 = vmatprep.subr.mxu0 0.0
    %415 = vmatpush1.msra.mxu0 0.0
    %416 = vmatprep.subr.mxu0 0.0
    %417 = vmatpush1.msra.mxu0 0.0
    %418 = vmatprep.subr.mxu0 0.0
    %419 = vmatpush1.msra.mxu0 0.0
    %420 = vmatprep.subr.mxu0 0.0
    %421 = vmatpush1.msra.mxu0 0.0
    %422 = vmatprep.subr.mxu0 0.0
    %423 = vmatpush1.msra.mxu0 0.0
    %424 = vmatprep.subr.mxu0 0.0
    %425 = vmatpush1.msra.mxu0 0.0
    %426 = vmatprep.subr.mxu0 0.0
    %427 = vmatpush1.msra.mxu0 0.0
    %428 = vmatprep.subr.mxu0 0.0
    %429 = vmatpush1.msra.mxu0 0.0
    %430 = vmatprep.subr.mxu0 0.0
    %431 = vmatpush1.msra.mxu0 0.0
    %432 = vmatprep.mubr.f32.mxu0 0.0
    %433 = vmatmul.mubr.f32.gmra.mrb[0].mxu0 %v366
    %v434 = vpop.f32.mrb[0].mxu0
    %v435 = vadd.f32 %v362, %v434
    %v436 = vpop.f32.mrb[0].mxu0
    %437 = vdwg.mxu0
    %438 = vst [vmem:[#allocation5] sm:$0xff] %v435
    // Predicated region
    $region42: #{tpu_custom_call.1} parent=1 // pred_check
      _
    $region43: #{tpu_custom_call.1} parent=1 // pred_check_branch
      %440 = sbr.rel (0) target = $region45
    $region44: #{tpu_custom_call.1} parent=1 // pred_region
      %s442 = ssub.s32 128, 128
      %443 = vsyncadd [#allocation4], %s442
      %s445 = sshll.u32 [#allocation5], 4
      %s446 = int_to_ptr.vmem [resolvable:$true] %s445
      %448 = dma.vmem_to_hbm [thread:$0]  %s446, 128, %s9, [#allocation4]
    $region45: #{tpu_custom_call.1} parent=1 // pred_fallthru
      _
    // Predicated region
    $region46: #{tpu_custom_call.1} parent=1 // pred_check
      _
    $region47: #{tpu_custom_call.1} parent=1 // pred_check_branch
      %450 = sbr.rel (0) target = $region49
    $region48: #{tpu_custom_call.1} parent=1 // pred_region
      %451 = dma.done [#allocation4], 128
    $region49: #{tpu_custom_call.1} parent=1 // pred_fallthru
      _
    %452 = vsyncpa [#allocation3], 1
    %453 = vsyncpa [#allocation4], 1

</llo_original>
